<compile_context>
chip_gen: v7x
topology: tpu7x:2x2x1
jax: 0.10.0
libtpu: 0.0.40
codegen_flags: <defaults>
</compile_context>

<pallas_src>
import functools
import math

import jax
import jax.numpy as jnp
import numpy as np
from jax.experimental import pallas as pl
from jax.experimental.pallas import tpu as pltpu


# ---------------------------------------------------------------------------
# Kernel: one row-tile of positions -> one row-tile of the positional encoding
# ---------------------------------------------------------------------------
def _pe_kernel(pos_ref, div_ref, out_ref, *, half):
    pos = pos_ref[...]                 # (rows, 1)   flattened (seq*batch) positions
    div = div_ref[...]                 # (1, d_model) = [div_term, div_term]
    arg = pos * div                    # (rows, d_model) broadcast outer product (VPU)
    lane = jax.lax.broadcasted_iota(jnp.int32, arg.shape, 1)
    # first half of the lanes -> sin, second half -> cos (both on the EUP)
    out_ref[...] = jnp.where(lane < half, jnp.sin(arg), jnp.cos(arg))


# ---------------------------------------------------------------------------
# Wrapper
# ---------------------------------------------------------------------------
def positional_encoding(abs_pos, d_model, *, max_block_rows=512):
    """abs_pos: (seq_len, batch) -> (seq_len, batch, d_model), float32."""
    L, N = abs_pos.shape
    half = d_model // 2
    M = L * N

    # div_term once in the wrapper; tiled twice so the kernel needs no concat.
    div_term = jnp.exp(
        jnp.arange(0, d_model, 2, dtype=jnp.float32) * (-math.log(10000.0) / d_model)
    )
    div_full = jnp.concatenate([div_term, div_term]).reshape(1, d_model)

    # Row tile: single block for small inputs (no serial-grid overhead on
    # v5e/v6e); multiple-of-8 row tiles + "parallel" grid for large inputs
    # so both v7x TensorCores are used.
    block_rows = min(max_block_rows, ((M + 7) // 8) * 8)
    Mp = pl.cdiv(M, block_rows) * block_rows

    pos_flat = abs_pos.astype(jnp.float32).reshape(M)
    if Mp != M:
        pos_flat = jnp.pad(pos_flat, (0, Mp - M))
    pos_col = pos_flat.reshape(Mp, 1)

    out = pl.pallas_call(
        functools.partial(_pe_kernel, half=half),
        grid=(Mp // block_rows,),
        in_specs=[
            pl.BlockSpec((block_rows, 1), lambda i: (i, 0)),
            pl.BlockSpec((1, d_model), lambda i: (0, 0)),
        ],
        out_specs=pl.BlockSpec((block_rows, d_model), lambda i: (i, 0)),
        out_shape=jax.ShapeDtypeStruct((Mp, d_model), jnp.float32),
        compiler_params=pltpu.CompilerParams(dimension_semantics=("parallel",)),
    )(pos_col, div_full)

    return out[:M].reshape(L, N, d_model)


# ---------------------------------------------------------------------------
# Pure-JAX reference (matches the PyTorch forward)
# ---------------------------------------------------------------------------
def _ref_positional_encoding(abs_pos, d_model):
    div_term = jnp.exp(
        jnp.arange(0, d_model, 2, dtype=jnp.float32) * (-math.log(10000.0) / d_model)
    )
    ang = abs_pos.astype(jnp.float32)[..., None] * div_term
    return jnp.concatenate([jnp.sin(ang), jnp.cos(ang)], axis=-1)


if __name__ == "__main__":
    d_model = 32
    seq_len, batch = 8, 2

    key = jax.random.PRNGKey(0)
    abs_pos = jax.random.uniform(key, (seq_len, batch), jnp.float32, 0.0, 200.0)

    out = positional_encoding(abs_pos, d_model)
    out = jax.block_until_ready(out)

    ref = _ref_positional_encoding(abs_pos, d_model)
    assert out.shape == (seq_len, batch, d_model)
    np.testing.assert_allclose(np.asarray(out), np.asarray(ref), atol=1e-3, rtol=1e-3)

    print("KERNEL_OK")
</pallas_src>

<mosaic_0001>
module attributes {stable_mosaic.version = 11 : i64} {
  func.func @_pe_kernel(%arg0: i32, %arg1: memref<16x1xf32, #tpu.memory_space<vmem>>, %arg2: memref<1x32xf32, #tpu.memory_space<vmem>>, %arg3: memref<16x32xf32, #tpu.memory_space<vmem>>) attributes {dimension_semantics = [#tpu.dimension_semantics<parallel>], iteration_bounds = array<i64: 1>, scalar_prefetch = 0 : i64, scratch_operands = 0 : i64, tpu.core_type = #tpu.core_type<tc>, window_params = [{transform_indices = @transform_0, window_bounds = array<i64: 16, 1>}, {pipeline_mode = #tpu.pipeline_mode<synchronous>, transform_indices = @transform_1, window_bounds = array<i64: 1, 32>}, {transform_indices = @transform_2, window_bounds = array<i64: 16, 32>}]} {
    %c0 = arith.constant 0 : index
    %c0_0 = arith.constant 0 : index
    %0 = vector.load %arg1[%c0, %c0_0] : memref<16x1xf32, #tpu.memory_space<vmem>>, vector<16x1xf32>
    %c0_1 = arith.constant 0 : index
    %c0_2 = arith.constant 0 : index
    %1 = vector.load %arg2[%c0_1, %c0_2] : memref<1x32xf32, #tpu.memory_space<vmem>>, vector<1x32xf32>
    %2 = vector.broadcast %0 : vector<16x1xf32> to vector<16x32xf32>
    %3 = vector.broadcast %1 : vector<1x32xf32> to vector<16x32xf32>
    %4 = arith.mulf %2, %3 : vector<16x32xf32>
    %5 = tpu.iota {dimensions = array<i32: 1>} : vector<16x32xi32>
    %c16_i32 = arith.constant 16 : i32
    %6 = vector.broadcast %c16_i32 : i32 to vector<16x32xi32>
    %7 = arith.cmpi slt, %5, %6 : vector<16x32xi32>
    %8 = math.sin %4 : vector<16x32xf32>
    %9 = math.cos %4 : vector<16x32xf32>
    %10 = arith.select %7, %8, %9 : vector<16x32xi1>, vector<16x32xf32>
    %c0_3 = arith.constant 0 : index
    %c0_4 = arith.constant 0 : index
    %11 = vector.load %arg3[%c0_3, %c0_4] : memref<16x32xf32, #tpu.memory_space<vmem>>, vector<16x32xf32>
    tpu.vector_store %arg3[%c0_3, %c0_4], %10 {strides = array<i32>} : memref<16x32xf32, #tpu.memory_space<vmem>>, vector<16x32xf32>,
    return
  }
  func.func @transform_0(%arg0: i32) -> (i32, i32) {
    %c0_i32 = arith.constant 0 : i32
    %c0_i32_0 = arith.constant 0 : i32
    return %arg0, %c0_i32 : i32, i32
  }
  func.func @transform_1(%arg0: i32) -> (i32, i32) {
    %c0_i32 = arith.constant 0 : i32
    %c0_i32_0 = arith.constant 0 : i32
    %c0_i32_1 = arith.constant 0 : i32
    return %c0_i32, %c0_i32_0 : i32, i32
  }
  func.func @transform_2(%arg0: i32) -> (i32, i32) {
    %c0_i32 = arith.constant 0 : i32
    %c0_i32_0 = arith.constant 0 : i32
    return %arg0, %c0_i32 : i32, i32
  }
}

</mosaic_0001>

<llo_original>
// kernel: tpu_custom_call.1
$region0: #{tpu_custom_call.1}
  #allocation0 [shape = 'u32[]', space=smem, size = 0x4, offset = 0x4, fixed_abs, tag = 'smem constant byte address 0x4 - core index']
  #allocation1 [shape = 'u32[144,128]{1,0:T(1,128)}', space=vmem, size = 0x12000, scoped, tag = 'internal scratch']
  %s0 = inlined_call_operand.vmem [shape: f32[16,1], index: 0, kind: input, shape index: {}]
  %s1 = inlined_call_operand.vmem [shape: f32[1,32], index: 1, kind: input, shape index: {}]
  %s2 = inlined_call_operand.hbm [shape: f32[16,32], index: 2, kind: output, shape index: {}]
  %s3 = sld [smem:[#allocation0]]
  $region18: #{tpu_custom_call.1} parent=0
    _
  %s5 = ssub.s32 1, %s3
  %s6 = scalar_select 0, %s5, %s3
  $region1: #{tpu_custom_call.1} parent=0
    #allocation2 [shape = 'u8[8192]{0}', space=vmem, size = 0x2000, scoped, tag = 'output window, operand 0, single buffered']
    #allocation3 [shape = 's32[1]{0}', space=sflag, size = 0x4, scoped, tag = 'scoped memory for tpu_custom_call.1']
    %7 = vsyncpa [#allocation3], 0
    // Predicated region
    $region2: #{tpu_custom_call.1} parent=1 // pred_check
      _
    $region3: #{tpu_custom_call.1} parent=1 // pred_check_branch
      %9 = sbr.rel (0) target = $region5
    $region4: #{tpu_custom_call.1} parent=1 // pred_region
      _
    $region5: #{tpu_custom_call.1} parent=1 // pred_fallthru
      _
    // Predicated region
    $region6: #{tpu_custom_call.1} parent=1 // pred_check
      _
    $region7: #{tpu_custom_call.1} parent=1 // pred_check_branch
      %11 = sbr.rel (0) target = $region9
    $region8: #{tpu_custom_call.1} parent=1 // pred_region
      _
    $region9: #{tpu_custom_call.1} parent=1 // pred_fallthru
      _
    %v12 = vld [vmem:[%s0] sm:$0xff]
    %v13 = vld [vmem:[%s0 + $0x8] sm:$0xff]
    %v14 = vld [vmem:[%s1] sm:$0x1]
    %16 = vset.pattern.permute.xlu0 0
    %17 = vperm.xlu0 %16, %v12
    %v18 = vpop.permute.xlu0 %17
    %21 = vset.pattern.permute.xlu0 0
    %22 = vperm.xlu0 %21, %v13
    %v23 = vpop.permute.xlu0 %22
    %v26 = vlaneseq
    %v27 = vshrl.u32 %v26, 7
    %v28 = vsub.s32 0, %v27
    %v29 = vrot.slane %v14, %v28
    %v31 = vmul.f32 %v18, %v29
    %v32 = vmul.f32 %v23, %v29
    %v33 = vlaneseq
    %v34 = vand.u32 %v33, 127
    %vm35 = vcmp.lt.s32.totalorder %v34, 16
    %v36 = vand.u32 2147483647, %v31
    %vm37 = vcmp.le.f32.partialorder %v36, 0.7853982
    %vm38 = vcmp.lt.s32.totalorder %v31, 0
    %v39 = vand.u32 %v31, 2139095040
    %v40 = vshrl.u32 %v39, 23
    %v41 = vsub.s32 %v40, 127
    %v42 = vand.u32 2147483647, %v31
    %v43 = vand.u32 %v42, 8388607
    %v44 = vor.u32 %v43, 8388608
    %v45 = vsub.s32 0, %v44
    %v46 = vadd.s32 %v41, 1
    %vm47 = vcmp.gt.s32.totalorder %v46, 0
    %v48 = vsel %vm47, %v46, 0
    %v49 = vshrl.u32 %v48, 5
    %v50 = vand.u32 %v48, 31
    %v51 = vsub.s32 32, %v50
    %v52 = vshrl.u32 683565275, %v51
    %v53 = vshll.u32 683565275, %v50
    %v54 = vshrl.u32 2475754826, %v51
    %v55 = vor.u32 %v53, %v54
    %v56 = vshll.u32 2475754826, %v50
    %v57 = vshrl.u32 2131351028, %v51
    %v58 = vor.u32 %v56, %v57
    %v59 = vshll.u32 2131351028, %v50
    %v60 = vshrl.u32 2102212464, %v51
    %v61 = vor.u32 %v59, %v60
    %v62 = vshll.u32 2102212464, %v50
    %v63 = vshrl.u32 920167782, %v51
    %v64 = vor.u32 %v62, %v63
    %v65 = vshll.u32 920167782, %v50
    %v66 = vshrl.u32 1326507024, %v51
    %v67 = vor.u32 %v65, %v66
    %vm68 = vcmp.lt.s32.totalorder %v49, 1
    %vm69 = vcmp.lt.s32.totalorder %v49, 2
    %vm70 = vcmp.lt.s32.totalorder %v49, 3
    %vm71 = vcmp.lt.s32.totalorder %v49, 4
    %v72 = vsel %vm68, %v52, %v55
    %v73 = vsel %vm71, %v61, 2102212464
    %v74 = vsel %vm70, %v58, %v73
    %v75 = vsel %vm69, %v72, %v74
    %v76 = vsel %vm68, %v55, %v58
    %v77 = vsel %vm71, %v64, 920167782
    %v78 = vsel %vm70, %v61, %v77
    %v79 = vsel %vm69, %v76, %v78
    %v80 = vsel %vm68, %v58, %v61
    %v81 = vsel %vm71, %v67, 1326507024
    %v82 = vsel %vm70, %v64, %v81
    %v83 = vsel %vm69, %v80, %v82
    %v84 = vshll.u32 %v44, 8
    %v85 = vmul.u32.u64.compose %v84, %v83
    %v86 = vextract.low.u32 %v85
    %v87 = vextract.high.u32 %v85
    %v88 = vmul.u32.u64.compose %v84, %v79
    %v89 = vextract.low.u32 %v88
    %v90 = vextract.high.u32 %v88
    %v91 = vmul.u32 %v84, %v75
    %v92 = vadd.s32 %v87, %v89
    %vm93 = vc.u32 %v87, %v89
    %v94 = vadd.s32 %v90, 1
    %v95 = vsel %vm93, %v94, %v90
    %v96 = vadd.s32 %v91, %v95
    %v97 = vadd.s32 %v96, 536870912
    %v98 = vshrl.u32 %v97, 30
    %v99 = vshll.u32 %v98, 30
    %v100 = vsub.s32 %v96, %v99
    %vm101 = vcmp.lt.s32.totalorder %v100, 0
    %v102 = vsub.s32 0, %v100
    %v103 = vsel %vm101, %v102, %v100
    %v104 = vclz %v103
    %v105 = vsub.s32 %v104, 2
    %vm106 = vcmp.gt.s32.totalorder 0, %v105
    %v107 = vsel %vm106, 0, %v105
    %v108 = vsub.s32 32, %v107
    %v109 = vshll.u32 %v100, %v107
    %v110 = vshrl.u32 %v92, %v108
    %v111 = vor.u32 %v109, %v110
    %v112 = vsub.s32 4294967266, %v107
    %v113 = vadd.s32 %v112, 127
    %v114 = vshll.u32 %v113, 23
    %v115 = vor.u32 4788187, %v114
    %v116 = vand.u32 2147483647, %v115
    %v118 = vcvt.s32.f32 %v111
    %v119 = vmul.f32 %v118, %v116
    %v120 = vxor.u32 %v119, 2147483648
    %v121 = vsel %vm38, %v120, %v119
    %v122 = vsub.s32 4, %v98
    %v123 = vsel %vm38, %v122, %v98
    %v124 = vsel %vm37, %v31, %v121
    %v125 = vsel %vm37, 0, %v123
    %v126 = vcosq.f32.pop %v124
    %v127 = vsinq.f32.pop %v124
    %vm128 = vweird.f32 %v31
    %v129 = vadd.s32 %v125, 3
    %v130 = vand.u32 %v129, 3
    %vm131 = vcmp.lt.s32.totalorder %v130, 2
    %vm132 = vcmp.eq.s32.totalorder %v130, 0
    %v133 = vxor.u32 %v127, 2147483648
    %v134 = vsel %vm132, %v126, %v133
    %vm135 = vcmp.eq.s32.totalorder %v130, 2
    %v136 = vxor.u32 %v126, 2147483648
    %v137 = vsel %vm135, %v136, %v127
    %v138 = vsel %vm131, %v134, %v137
    %v139 = vsel %vm128, nan, %v138
    %v140 = vand.u32 2147483647, %v32
    %vm141 = vcmp.le.f32.partialorder %v140, 0.7853982
    %vm142 = vcmp.lt.s32.totalorder %v32, 0
    %v143 = vand.u32 %v32, 2139095040
    %v144 = vshrl.u32 %v143, 23
    %v145 = vsub.s32 %v144, 127
    %v146 = vand.u32 2147483647, %v32
    %v147 = vand.u32 %v146, 8388607
    %v148 = vor.u32 %v147, 8388608
    %v149 = vsub.s32 0, %v148
    %v150 = vadd.s32 %v145, 1
    %vm151 = vcmp.gt.s32.totalorder %v150, 0
    %v152 = vsel %vm151, %v150, 0
    %v153 = vshrl.u32 %v152, 5
    %v154 = vand.u32 %v152, 31
    %v155 = vsub.s32 32, %v154
    %v156 = vshrl.u32 683565275, %v155
    %v157 = vshll.u32 683565275, %v154
    %v158 = vshrl.u32 2475754826, %v155
    %v159 = vor.u32 %v157, %v158
    %v160 = vshll.u32 2475754826, %v154
    %v161 = vshrl.u32 2131351028, %v155
    %v162 = vor.u32 %v160, %v161
    %v163 = vshll.u32 2131351028, %v154
    %v164 = vshrl.u32 2102212464, %v155
    %v165 = vor.u32 %v163, %v164
    %v166 = vshll.u32 2102212464, %v154
    %v167 = vshrl.u32 920167782, %v155
    %v168 = vor.u32 %v166, %v167
    %v169 = vshll.u32 920167782, %v154
    %v170 = vshrl.u32 1326507024, %v155
    %v171 = vor.u32 %v169, %v170
    %vm172 = vcmp.lt.s32.totalorder %v153, 1
    %vm173 = vcmp.lt.s32.totalorder %v153, 2
    %vm174 = vcmp.lt.s32.totalorder %v153, 3
    %vm175 = vcmp.lt.s32.totalorder %v153, 4
    %v176 = vsel %vm172, %v156, %v159
    %v177 = vsel %vm175, %v165, 2102212464
    %v178 = vsel %vm174, %v162, %v177
    %v179 = vsel %vm173, %v176, %v178
    %v180 = vsel %vm172, %v159, %v162
    %v181 = vsel %vm175, %v168, 920167782
    %v182 = vsel %vm174, %v165, %v181
    %v183 = vsel %vm173, %v180, %v182
    %v184 = vsel %vm172, %v162, %v165
    %v185 = vsel %vm175, %v171, 1326507024
    %v186 = vsel %vm174, %v168, %v185
    %v187 = vsel %vm173, %v184, %v186
    %v188 = vshll.u32 %v148, 8
    %v189 = vmul.u32.u64.compose %v188, %v187
    %v190 = vextract.low.u32 %v189
    %v191 = vextract.high.u32 %v189
    %v192 = vmul.u32.u64.compose %v188, %v183
    %v193 = vextract.low.u32 %v192
    %v194 = vextract.high.u32 %v192
    %v195 = vmul.u32 %v188, %v179
    %v196 = vadd.s32 %v191, %v193
    %vm197 = vc.u32 %v191, %v193
    %v198 = vadd.s32 %v194, 1
    %v199 = vsel %vm197, %v198, %v194
    %v200 = vadd.s32 %v195, %v199
    %v201 = vadd.s32 %v200, 536870912
    %v202 = vshrl.u32 %v201, 30
    %v203 = vshll.u32 %v202, 30
    %v204 = vsub.s32 %v200, %v203
    %vm205 = vcmp.lt.s32.totalorder %v204, 0
    %v206 = vsub.s32 0, %v204
    %v207 = vsel %vm205, %v206, %v204
    %v208 = vclz %v207
    %v209 = vsub.s32 %v208, 2
    %vm210 = vcmp.gt.s32.totalorder 0, %v209
    %v211 = vsel %vm210, 0, %v209
    %v212 = vsub.s32 32, %v211
    %v213 = vshll.u32 %v204, %v211
    %v214 = vshrl.u32 %v196, %v212
    %v215 = vor.u32 %v213, %v214
    %v216 = vsub.s32 4294967266, %v211
    %v217 = vadd.s32 %v216, 127
    %v218 = vshll.u32 %v217, 23
    %v219 = vor.u32 4788187, %v218
    %v220 = vand.u32 2147483647, %v219
    %v222 = vcvt.s32.f32 %v215
    %v223 = vmul.f32 %v222, %v220
    %v224 = vxor.u32 %v223, 2147483648
    %v225 = vsel %vm142, %v224, %v223
    %v226 = vsub.s32 4, %v202
    %v227 = vsel %vm142, %v226, %v202
    %v228 = vsel %vm141, %v32, %v225
    %v229 = vsel %vm141, 0, %v227
    %v230 = vcosq.f32.pop %v228
    %v231 = vsinq.f32.pop %v228
    %vm232 = vweird.f32 %v32
    %v233 = vadd.s32 %v229, 3
    %v234 = vand.u32 %v233, 3
    %vm235 = vcmp.lt.s32.totalorder %v234, 2
    %vm236 = vcmp.eq.s32.totalorder %v234, 0
    %v237 = vxor.u32 %v231, 2147483648
    %v238 = vsel %vm236, %v230, %v237
    %vm239 = vcmp.eq.s32.totalorder %v234, 2
    %v240 = vxor.u32 %v230, 2147483648
    %v241 = vsel %vm239, %v240, %v231
    %v242 = vsel %vm235, %v238, %v241
    %v243 = vsel %vm232, nan, %v242
    %v244 = vand.u32 2147483647, %v31
    %vm245 = vcmp.le.f32.partialorder %v244, 0.7853982
    %vm246 = vcmp.lt.s32.totalorder %v31, 0
    %v247 = vand.u32 %v31, 2139095040
    %v248 = vshrl.u32 %v247, 23
    %v249 = vsub.s32 %v248, 127
    %v250 = vand.u32 2147483647, %v31
    %v251 = vand.u32 %v250, 8388607
    %v252 = vor.u32 %v251, 8388608
    %v253 = vsub.s32 0, %v252
    %v254 = vadd.s32 %v249, 1
    %vm255 = vcmp.gt.s32.totalorder %v254, 0
    %v256 = vsel %vm255, %v254, 0
    %v257 = vshrl.u32 %v256, 5
    %v258 = vand.u32 %v256, 31
    %v259 = vsub.s32 32, %v258
    %v260 = vshrl.u32 683565275, %v259
    %v261 = vshll.u32 683565275, %v258
    %v262 = vshrl.u32 2475754826, %v259
    %v263 = vor.u32 %v261, %v262
    %v264 = vshll.u32 2475754826, %v258
    %v265 = vshrl.u32 2131351028, %v259
    %v266 = vor.u32 %v264, %v265
    %v267 = vshll.u32 2131351028, %v258
    %v268 = vshrl.u32 2102212464, %v259
    %v269 = vor.u32 %v267, %v268
    %v270 = vshll.u32 2102212464, %v258
    %v271 = vshrl.u32 920167782, %v259
    %v272 = vor.u32 %v270, %v271
    %v273 = vshll.u32 920167782, %v258
    %v274 = vshrl.u32 1326507024, %v259
    %v275 = vor.u32 %v273, %v274
    %vm276 = vcmp.lt.s32.totalorder %v257, 1
    %vm277 = vcmp.lt.s32.totalorder %v257, 2
    %vm278 = vcmp.lt.s32.totalorder %v257, 3
    %vm279 = vcmp.lt.s32.totalorder %v257, 4
    %v280 = vsel %vm276, %v260, %v263
    %v281 = vsel %vm279, %v269, 2102212464
    %v282 = vsel %vm278, %v266, %v281
    %v283 = vsel %vm277, %v280, %v282
    %v284 = vsel %vm276, %v263, %v266
    %v285 = vsel %vm279, %v272, 920167782
    %v286 = vsel %vm278, %v269, %v285
    %v287 = vsel %vm277, %v284, %v286
    %v288 = vsel %vm276, %v266, %v269
    %v289 = vsel %vm279, %v275, 1326507024
    %v290 = vsel %vm278, %v272, %v289
    %v291 = vsel %vm277, %v288, %v290
    %v292 = vshll.u32 %v252, 8
    %v293 = vmul.u32.u64.compose %v292, %v291
    %v294 = vextract.low.u32 %v293
    %v295 = vextract.high.u32 %v293
    %v296 = vmul.u32.u64.compose %v292, %v287
    %v297 = vextract.low.u32 %v296
    %v298 = vextract.high.u32 %v296
    %v299 = vmul.u32 %v292, %v283
    %v300 = vadd.s32 %v295, %v297
    %vm301 = vc.u32 %v295, %v297
    %v302 = vadd.s32 %v298, 1
    %v303 = vsel %vm301, %v302, %v298
    %v304 = vadd.s32 %v299, %v303
    %v305 = vadd.s32 %v304, 536870912
    %v306 = vshrl.u32 %v305, 30
    %v307 = vshll.u32 %v306, 30
    %v308 = vsub.s32 %v304, %v307
    %vm309 = vcmp.lt.s32.totalorder %v308, 0
    %v310 = vsub.s32 0, %v308
    %v311 = vsel %vm309, %v310, %v308
    %v312 = vclz %v311
    %v313 = vsub.s32 %v312, 2
    %vm314 = vcmp.gt.s32.totalorder 0, %v313
    %v315 = vsel %vm314, 0, %v313
    %v316 = vsub.s32 32, %v315
    %v317 = vshll.u32 %v308, %v315
    %v318 = vshrl.u32 %v300, %v316
    %v319 = vor.u32 %v317, %v318
    %v320 = vsub.s32 4294967266, %v315
    %v321 = vadd.s32 %v320, 127
    %v322 = vshll.u32 %v321, 23
    %v323 = vor.u32 4788187, %v322
    %v324 = vand.u32 2147483647, %v323
    %v326 = vcvt.s32.f32 %v319
    %v327 = vmul.f32 %v326, %v324
    %v328 = vxor.u32 %v327, 2147483648
    %v329 = vsel %vm246, %v328, %v327
    %v330 = vsub.s32 4, %v306
    %v331 = vsel %vm246, %v330, %v306
    %v332 = vsel %vm245, %v31, %v329
    %v333 = vsel %vm245, 0, %v331
    %v334 = vcosq.f32.pop %v332
    %v335 = vsinq.f32.pop %v332
    %vm336 = vweird.f32 %v31
    %v337 = vand.u32 %v333, 3
    %vm338 = vcmp.lt.s32.totalorder %v337, 2
    %vm339 = vcmp.eq.s32.totalorder %v337, 0
    %v340 = vxor.u32 %v335, 2147483648
    %v341 = vsel %vm339, %v334, %v340
    %vm342 = vcmp.eq.s32.totalorder %v337, 2
    %v343 = vxor.u32 %v334, 2147483648
    %v344 = vsel %vm342, %v343, %v335
    %v345 = vsel %vm338, %v341, %v344
    %v346 = vsel %vm336, nan, %v345
    %v347 = vand.u32 2147483647, %v32
    %vm348 = vcmp.le.f32.partialorder %v347, 0.7853982
    %vm349 = vcmp.lt.s32.totalorder %v32, 0
    %v350 = vand.u32 %v32, 2139095040
    %v351 = vshrl.u32 %v350, 23
    %v352 = vsub.s32 %v351, 127
    %v353 = vand.u32 2147483647, %v32
    %v354 = vand.u32 %v353, 8388607
    %v355 = vor.u32 %v354, 8388608
    %v356 = vsub.s32 0, %v355
    %v357 = vadd.s32 %v352, 1
    %vm358 = vcmp.gt.s32.totalorder %v357, 0
    %v359 = vsel %vm358, %v357, 0
    %v360 = vshrl.u32 %v359, 5
    %v361 = vand.u32 %v359, 31
    %v362 = vsub.s32 32, %v361
    %v363 = vshrl.u32 683565275, %v362
    %v364 = vshll.u32 683565275, %v361
    %v365 = vshrl.u32 2475754826, %v362
    %v366 = vor.u32 %v364, %v365
    %v367 = vshll.u32 2475754826, %v361
    %v368 = vshrl.u32 2131351028, %v362
    %v369 = vor.u32 %v367, %v368
    %v370 = vshll.u32 2131351028, %v361
    %v371 = vshrl.u32 2102212464, %v362
    %v372 = vor.u32 %v370, %v371
    %v373 = vshll.u32 2102212464, %v361
    %v374 = vshrl.u32 920167782, %v362
    %v375 = vor.u32 %v373, %v374
    %v376 = vshll.u32 920167782, %v361
    %v377 = vshrl.u32 1326507024, %v362
    %v378 = vor.u32 %v376, %v377
    %vm379 = vcmp.lt.s32.totalorder %v360, 1
    %vm380 = vcmp.lt.s32.totalorder %v360, 2
    %vm381 = vcmp.lt.s32.totalorder %v360, 3
    %vm382 = vcmp.lt.s32.totalorder %v360, 4
    %v383 = vsel %vm379, %v363, %v366
    %v384 = vsel %vm382, %v372, 2102212464
    %v385 = vsel %vm381, %v369, %v384
    %v386 = vsel %vm380, %v383, %v385
    %v387 = vsel %vm379, %v366, %v369
    %v388 = vsel %vm382, %v375, 920167782
    %v389 = vsel %vm381, %v372, %v388
    %v390 = vsel %vm380, %v387, %v389
    %v391 = vsel %vm379, %v369, %v372
    %v392 = vsel %vm382, %v378, 1326507024
    %v393 = vsel %vm381, %v375, %v392
    %v394 = vsel %vm380, %v391, %v393
    %v395 = vshll.u32 %v355, 8
    %v396 = vmul.u32.u64.compose %v395, %v394
    %v397 = vextract.low.u32 %v396
    %v398 = vextract.high.u32 %v396
    %v399 = vmul.u32.u64.compose %v395, %v390
    %v400 = vextract.low.u32 %v399
    %v401 = vextract.high.u32 %v399
    %v402 = vmul.u32 %v395, %v386
    %v403 = vadd.s32 %v398, %v400
    %vm404 = vc.u32 %v398, %v400
    %v405 = vadd.s32 %v401, 1
    %v406 = vsel %vm404, %v405, %v401
    %v407 = vadd.s32 %v402, %v406
    %v408 = vadd.s32 %v407, 536870912
    %v409 = vshrl.u32 %v408, 30
    %v410 = vshll.u32 %v409, 30
    %v411 = vsub.s32 %v407, %v410
    %vm412 = vcmp.lt.s32.totalorder %v411, 0
    %v413 = vsub.s32 0, %v411
    %v414 = vsel %vm412, %v413, %v411
    %v415 = vclz %v414
    %v416 = vsub.s32 %v415, 2
    %vm417 = vcmp.gt.s32.totalorder 0, %v416
    %v418 = vsel %vm417, 0, %v416
    %v419 = vsub.s32 32, %v418
    %v420 = vshll.u32 %v411, %v418
    %v421 = vshrl.u32 %v403, %v419
    %v422 = vor.u32 %v420, %v421
    %v423 = vsub.s32 4294967266, %v418
    %v424 = vadd.s32 %v423, 127
    %v425 = vshll.u32 %v424, 23
    %v426 = vor.u32 4788187, %v425
    %v427 = vand.u32 2147483647, %v426
    %v429 = vcvt.s32.f32 %v422
    %v430 = vmul.f32 %v429, %v427
    %v431 = vxor.u32 %v430, 2147483648
    %v432 = vsel %vm349, %v431, %v430
    %v433 = vsub.s32 4, %v409
    %v434 = vsel %vm349, %v433, %v409
    %v435 = vsel %vm348, %v32, %v432
    %v436 = vsel %vm348, 0, %v434
    %v437 = vcosq.f32.pop %v435
    %v438 = vsinq.f32.pop %v435
    %vm439 = vweird.f32 %v32
    %v440 = vand.u32 %v436, 3
    %vm441 = vcmp.lt.s32.totalorder %v440, 2
    %vm442 = vcmp.eq.s32.totalorder %v440, 0
    %v443 = vxor.u32 %v438, 2147483648
    %v444 = vsel %vm442, %v437, %v443
    %vm445 = vcmp.eq.s32.totalorder %v440, 2
    %v446 = vxor.u32 %v437, 2147483648
    %v447 = vsel %vm445, %v446, %v438
    %v448 = vsel %vm441, %v444, %v447
    %v449 = vsel %vm439, nan, %v448
    %v450 = vsel %vm35, %v139, %v346
    %v451 = vsel %vm35, %v243, %v449
    %vm452 = vcmask 261120
    %453 = vst.msk [vmem:[#allocation2] sm:$0xff] %vm452, %v450
    %454 = vst.msk [vmem:[#allocation2 + $0x8] sm:$0xff] %vm452, %v451
    // Predicated region
    $region10: #{tpu_custom_call.1} parent=1 // pred_check
      _
    $region11: #{tpu_custom_call.1} parent=1 // pred_check_branch
      %456 = sbr.rel (0) target = $region13
    $region12: #{tpu_custom_call.1} parent=1 // pred_region
      %s458 = ssub.s32 256, 256
      %459 = vsyncadd [#allocation3], %s458
      %s460 = sshll.u32 [#allocation2], 4
      %s461 = int_to_ptr.vmem [resolvable:$true] %s460
      %466 = dma.vmem_to_hbm [thread:$0]  %s461, 256, %s2, [#allocation3], 128, 128, 8
    $region13: #{tpu_custom_call.1} parent=1 // pred_fallthru
      _
    // Predicated region
    $region14: #{tpu_custom_call.1} parent=1 // pred_check
      _
    $region15: #{tpu_custom_call.1} parent=1 // pred_check_branch
      %468 = sbr.rel (0) target = $region17
    $region16: #{tpu_custom_call.1} parent=1 // pred_region
      %469 = dma.done [#allocation3], 256
    $region17: #{tpu_custom_call.1} parent=1 // pred_fallthru
      _
    %470 = vsyncpa [#allocation3], 1

</llo_original>
